<compile_context>
chip_gen: v6e
topology: v6e:2x2x1
jax: 0.10.0
libtpu: 0.0.40
codegen_flags: <defaults>
</compile_context>

<pallas_src>
import numpy as np

import jax
import jax.numpy as jnp
from jax import lax
from jax.experimental import pallas as pl
from jax.experimental.pallas import tpu as pltpu


# ----------------------------- host-side constants ----------------------------

def _pool_constants(h, w):
    """Constants for one 3x3 / stride-2 / pad-1 pooling step at input size (h, w).

    masks : (4, h*w) f32  rows = validity (1.0/0.0) of the left / right / up / down
                          neighbour at every flattened position (masks wrapped lane rolls).
    sel   : (h*w, ho*wo) bf16  0/1 selection matrix picking window centres (2i, 2j);
                          decimates the fused (window_sum/9 + window_max) map.
    """
    ho, wo = (h - 1) // 2 + 1, (w - 1) // 2 + 1
    col = np.tile(np.arange(w), h)
    row = np.repeat(np.arange(h), w)
    masks = np.stack([(col >= 1), (col <= w - 2),
                      (row >= 1), (row <= h - 2)], 0).astype(np.float32)   # (4, h*w)

    hh, ii = np.arange(h)[:, None], np.arange(ho)[None, :]
    ww, jj = np.arange(w)[:, None], np.arange(wo)[None, :]
    sel_h = (hh == 2 * ii).astype(np.float32)                              # (h, ho)
    sel_w = (ww == 2 * jj).astype(np.float32)                              # (w, wo)
    sel = (sel_h[:, None, :, None] * sel_w[None, :, None, :]).reshape(h * w, ho * wo)
    return jnp.asarray(masks), jnp.asarray(sel, dtype=jnp.bfloat16)


# ----------------------------------- kernel -----------------------------------

def _pool_step(x, masks, sel_mat, w):
    """One avg_pool + max_pool + stride-2 step on a lane-dense (M, h*w) feature map."""
    hw = x.shape[1]
    neg = jnp.float32(-jnp.inf)
    m_l, m_r = masks[0:1, :], masks[1:2, :]
    m_u, m_d = masks[2:3, :], masks[3:4, :]

    # Horizontal +-1 neighbours: two lane rolls shared by the sum and the max paths.
    xl = pltpu.roll(x, shift=1 % hw, axis=1)      # left neighbour value at each position
    xr = pltpu.roll(x, shift=(-1) % hw, axis=1)   # right neighbour value
    row_sum = x + xl * m_l + xr * m_r
    row_max = jnp.maximum(x, jnp.maximum(jnp.where(m_l > 0, xl, neg),
                                         jnp.where(m_r > 0, xr, neg)))

    # Vertical +-1 neighbours of the row aggregates (separable 3x3 window).
    su = pltpu.roll(row_sum, shift=w % hw, axis=1)
    sd = pltpu.roll(row_sum, shift=(-w) % hw, axis=1)
    mu = pltpu.roll(row_max, shift=w % hw, axis=1)
    md = pltpu.roll(row_max, shift=(-w) % hw, axis=1)
    full_sum = row_sum + su * m_u + sd * m_d
    full_max = jnp.maximum(row_max, jnp.maximum(jnp.where(m_u > 0, mu, neg),
                                                jnp.where(m_d > 0, md, neg)))

    # avg pool (count_include_pad=True -> fixed /9) + max pool, then stride-2 decimation
    # of both at once via a single bf16 0/1-selection matmul on the MXU.
    combined = full_sum * jnp.float32(1.0 / 9.0) + full_max
    return jnp.dot(combined.astype(jnp.bfloat16), sel_mat,
                   preferred_element_type=jnp.float32)


def _make_kernel(step_shapes):
    n_steps = len(step_shapes)

    def kernel(*refs):
        x_ref = refs[0]
        o_ref = refs[1 + 2 * n_steps]
        x = x_ref[...]                                   # (B*C, H*W), lane dense
        if x.dtype != jnp.float32:                       # skip the cast for f32 inputs
            x = x.astype(jnp.float32)
        for s, (_, w_s, _, _) in enumerate(step_shapes):
            masks_ref, sel_ref = refs[1 + 2 * s], refs[2 + 2 * s]
            x = _pool_step(x, masks_ref[...], sel_ref[...], w_s)
        o_ref[...] = x.astype(o_ref.dtype)

    return kernel


# ------------------------------- host wrapper ----------------------------------

def input_injection(x, target):
    """Forward pass of InputInjection: pool `x` until its height matches `target`'s."""
    h_in, h_tar = x.shape[2], target.shape[2]
    if h_in == h_tar:
        return x

    B, C, H, W = x.shape

    # Unroll the pooling schedule (static: depends only on shapes).
    step_shapes = []
    h, w = H, W
    while h != h_tar:
        ho, wo = (h - 1) // 2 + 1, (w - 1) // 2 + 1
        if ho == h:
            # The PyTorch while-loop would never terminate in this case.
            raise ValueError(f"target height {h_tar} is not reachable from {h_in} "
                             "with 3x3 / stride-2 / pad-1 pooling")
        step_shapes.append((h, w, ho, wo))
        h, w = ho, wo
    h_out, w_out = h, w

    consts = [_pool_constants(hs, ws) for (hs, ws, _, _) in step_shapes]

    # Fold batch and channels into the matmul M dimension -> lane-dense (B*C, H*W) slab,
    # single grid step (no per-batch serial loop).
    M = B * C
    x_flat = x.reshape(M, H * W)

    operands = [x_flat]
    in_specs = [pl.BlockSpec((M, H * W), lambda i: (0, 0))]
    for masks, sel in consts:
        for a in (masks, sel):
            operands.append(a)
            in_specs.append(pl.BlockSpec(a.shape, lambda i: (0, 0)))

    out_flat = pl.pallas_call(
        _make_kernel(step_shapes),
        out_shape=jax.ShapeDtypeStruct((M, h_out * w_out), x.dtype),
        grid=(1,),
        in_specs=in_specs,
        out_specs=pl.BlockSpec((M, h_out * w_out), lambda i: (0, 0)),
        compiler_params=pltpu.CompilerParams(dimension_semantics=("arbitrary",)),
    )(*operands)
    return out_flat.reshape(B, C, h_out, w_out)


# --------------------------- pure-JAX reference (check) -------------------------

def input_injection_reference(x, target):
    h_tar = target.shape[2]
    if x.shape[2] == h_tar:
        return x
    pads = [(0, 0), (0, 0), (1, 1), (1, 1)]
    while True:
        avg = lax.reduce_window(x, 0.0, lax.add,
                                (1, 1, 3, 3), (1, 1, 2, 2), pads) / 9.0
        mx = lax.reduce_window(x, -jnp.inf, lax.max,
                               (1, 1, 3, 3), (1, 1, 2, 2), pads)
        x = avg + mx
        if x.shape[2] == h_tar:
            return x


# ------------------------------------- main -------------------------------------

if __name__ == "__main__":
    key = jax.random.PRNGKey(0)
    x = jax.random.normal(key, (2, 4, 16, 16), jnp.float32)
    target = jnp.zeros((2, 4, 4, 4), jnp.float32)   # only its height (dim 2) is used
    # 16 -> 8 -> 4: two fused pooling steps inside one pallas_call, one grid step.

    out = jax.block_until_ready(input_injection(x, target))
    ref = jax.block_until_ready(input_injection_reference(x, target))

    assert out.shape == ref.shape == (2, 4, 4, 4)
    # Window sum / max are exact f32 on the VPU; only the bf16 0/1-selection matmul rounds.
    np.testing.assert_allclose(np.asarray(out), np.asarray(ref), rtol=2e-2, atol=2e-2)
    print("KERNEL_OK")
</pallas_src>

<mosaic_0001>
module attributes {stable_mosaic.version = 11 : i64} {
  func.func @kernel(%arg0: i32, %arg1: memref<8x256xf32, #tpu.memory_space<vmem>>, %arg2: memref<4x256xf32, #tpu.memory_space<vmem>>, %arg3: memref<256x64xbf16, #tpu.memory_space<vmem>>, %arg4: memref<4x64xf32, #tpu.memory_space<vmem>>, %arg5: memref<64x16xbf16, #tpu.memory_space<vmem>>, %arg6: memref<8x16xf32, #tpu.memory_space<vmem>>) attributes {dimension_semantics = [#tpu.dimension_semantics<arbitrary>], iteration_bounds = array<i64: 1>, scalar_prefetch = 0 : i64, scratch_operands = 0 : i64, tpu.core_type = #tpu.core_type<tc>, window_params = [{pipeline_mode = #tpu.pipeline_mode<synchronous>, transform_indices = @transform_0, window_bounds = array<i64: 8, 256>}, {pipeline_mode = #tpu.pipeline_mode<synchronous>, transform_indices = @transform_1, window_bounds = array<i64: 4, 256>}, {pipeline_mode = #tpu.pipeline_mode<synchronous>, transform_indices = @transform_2, window_bounds = array<i64: 256, 64>}, {pipeline_mode = #tpu.pipeline_mode<synchronous>, transform_indices = @transform_3, window_bounds = array<i64: 4, 64>}, {pipeline_mode = #tpu.pipeline_mode<synchronous>, transform_indices = @transform_4, window_bounds = array<i64: 64, 16>}, {pipeline_mode = #tpu.pipeline_mode<synchronous>, transform_indices = @transform_5, window_bounds = array<i64: 8, 16>}]} {
    %c0 = arith.constant 0 : index
    %c0_0 = arith.constant 0 : index
    %0 = vector.load %arg1[%c0, %c0_0] : memref<8x256xf32, #tpu.memory_space<vmem>>, vector<8x256xf32>
    %c0_1 = arith.constant 0 : index
    %c0_2 = arith.constant 0 : index
    %1 = vector.load %arg2[%c0_1, %c0_2] : memref<4x256xf32, #tpu.memory_space<vmem>>, vector<4x256xf32>
    %c0_3 = arith.constant 0 : index
    %c0_4 = arith.constant 0 : index
    %2 = vector.load %arg3[%c0_3, %c0_4] : memref<256x64xbf16, #tpu.memory_space<vmem>>, vector<256x64xbf16>
    %3 = vector.extract_strided_slice %1 {offsets = [0, 0], sizes = [1, 256], strides = [1, 1]} : vector<4x256xf32> to vector<1x256xf32>
    %4 = vector.extract_strided_slice %1 {offsets = [1, 0], sizes = [1, 256], strides = [1, 1]} : vector<4x256xf32> to vector<1x256xf32>
    %5 = vector.extract_strided_slice %1 {offsets = [2, 0], sizes = [1, 256], strides = [1, 1]} : vector<4x256xf32> to vector<1x256xf32>
    %6 = vector.extract_strided_slice %1 {offsets = [3, 0], sizes = [1, 256], strides = [1, 1]} : vector<4x256xf32> to vector<1x256xf32>
    %c1_i32 = arith.constant 1 : i32
    %7 = tpu.dynamic_rotate %0 by %c1_i32 dim 1 : vector<8x256xf32>, i32 -> vector<8x256xf32>
    %c255_i32 = arith.constant 255 : i32
    %8 = tpu.dynamic_rotate %0 by %c255_i32 dim 1 : vector<8x256xf32>, i32 -> vector<8x256xf32>
    %9 = vector.broadcast %3 : vector<1x256xf32> to vector<8x256xf32>
    %10 = arith.mulf %7, %9 : vector<8x256xf32>
    %11 = arith.addf %0, %10 : vector<8x256xf32>
    %12 = vector.broadcast %4 : vector<1x256xf32> to vector<8x256xf32>
    %13 = arith.mulf %8, %12 : vector<8x256xf32>
    %14 = arith.addf %11, %13 : vector<8x256xf32>
    %cst = arith.constant 0.000000e+00 : f32
    %15 = vector.broadcast %cst : f32 to vector<1x256xf32>
    %16 = arith.cmpf ogt, %3, %15 : vector<1x256xf32>
    %cst_5 = arith.constant 0xFF800000 : f32
    %17 = vector.shape_cast %16 : vector<1x256xi1> to vector<1x256xi1>
    %18 = vector.broadcast %17 : vector<1x256xi1> to vector<8x256xi1>
    %19 = vector.broadcast %cst_5 : f32 to vector<8x256xf32>
    %20 = arith.select %18, %7, %19 : vector<8x256xi1>, vector<8x256xf32>
    %cst_6 = arith.constant 0.000000e+00 : f32
    %21 = vector.broadcast %cst_6 : f32 to vector<1x256xf32>
    %22 = arith.cmpf ogt, %4, %21 : vector<1x256xf32>
    %cst_7 = arith.constant 0xFF800000 : f32
    %23 = vector.shape_cast %22 : vector<1x256xi1> to vector<1x256xi1>
    %24 = vector.broadcast %23 : vector<1x256xi1> to vector<8x256xi1>
    %25 = vector.broadcast %cst_7 : f32 to vector<8x256xf32>
    %26 = arith.select %24, %8, %25 : vector<8x256xi1>, vector<8x256xf32>
    %27 = arith.maximumf %20, %26 : vector<8x256xf32>
    %28 = arith.maximumf %0, %27 : vector<8x256xf32>
    %c16_i32 = arith.constant 16 : i32
    %29 = tpu.dynamic_rotate %14 by %c16_i32 dim 1 : vector<8x256xf32>, i32 -> vector<8x256xf32>
    %c240_i32 = arith.constant 240 : i32
    %30 = tpu.dynamic_rotate %14 by %c240_i32 dim 1 : vector<8x256xf32>, i32 -> vector<8x256xf32>
    %c16_i32_8 = arith.constant 16 : i32
    %31 = tpu.dynamic_rotate %28 by %c16_i32_8 dim 1 : vector<8x256xf32>, i32 -> vector<8x256xf32>
    %c240_i32_9 = arith.constant 240 : i32
    %32 = tpu.dynamic_rotate %28 by %c240_i32_9 dim 1 : vector<8x256xf32>, i32 -> vector<8x256xf32>
    %33 = vector.broadcast %5 : vector<1x256xf32> to vector<8x256xf32>
    %34 = arith.mulf %29, %33 : vector<8x256xf32>
    %35 = arith.addf %14, %34 : vector<8x256xf32>
    %36 = vector.broadcast %6 : vector<1x256xf32> to vector<8x256xf32>
    %37 = arith.mulf %30, %36 : vector<8x256xf32>
    %38 = arith.addf %35, %37 : vector<8x256xf32>
    %cst_10 = arith.constant 0.000000e+00 : f32
    %39 = vector.broadcast %cst_10 : f32 to vector<1x256xf32>
    %40 = arith.cmpf ogt, %5, %39 : vector<1x256xf32>
    %cst_11 = arith.constant 0xFF800000 : f32
    %41 = vector.shape_cast %40 : vector<1x256xi1> to vector<1x256xi1>
    %42 = vector.broadcast %41 : vector<1x256xi1> to vector<8x256xi1>
    %43 = vector.broadcast %cst_11 : f32 to vector<8x256xf32>
    %44 = arith.select %42, %31, %43 : vector<8x256xi1>, vector<8x256xf32>
    %cst_12 = arith.constant 0.000000e+00 : f32
    %45 = vector.broadcast %cst_12 : f32 to vector<1x256xf32>
    %46 = arith.cmpf ogt, %6, %45 : vector<1x256xf32>
    %cst_13 = arith.constant 0xFF800000 : f32
    %47 = vector.shape_cast %46 : vector<1x256xi1> to vector<1x256xi1>
    %48 = vector.broadcast %47 : vector<1x256xi1> to vector<8x256xi1>
    %49 = vector.broadcast %cst_13 : f32 to vector<8x256xf32>
    %50 = arith.select %48, %32, %49 : vector<8x256xi1>, vector<8x256xf32>
    %51 = arith.maximumf %44, %50 : vector<8x256xf32>
    %52 = arith.maximumf %28, %51 : vector<8x256xf32>
    %cst_14 = arith.constant 0.111111112 : f32
    %53 = vector.broadcast %cst_14 : f32 to vector<8x256xf32>
    %54 = arith.mulf %38, %53 : vector<8x256xf32>
    %55 = arith.addf %54, %52 : vector<8x256xf32>
    %56 = arith.truncf %55 : vector<8x256xf32> to vector<8x256xbf16>
    %cst_15 = arith.constant dense<0.000000e+00> : vector<8x64xf32>
    %57 = tpu.matmul %56, %2, %cst_15 {dimension_numbers = #tpu.dot_dimension_numbers<[1], [0], [0], [1], [0, 0, 1, 1], [], []>} : vector<8x256xbf16>, vector<256x64xbf16>, vector<8x64xf32> -> vector<8x64xf32>
    %c0_16 = arith.constant 0 : index
    %c0_17 = arith.constant 0 : index
    %58 = vector.load %arg4[%c0_16, %c0_17] : memref<4x64xf32, #tpu.memory_space<vmem>>, vector<4x64xf32>
    %c0_18 = arith.constant 0 : index
    %c0_19 = arith.constant 0 : index
    %59 = vector.load %arg5[%c0_18, %c0_19] : memref<64x16xbf16, #tpu.memory_space<vmem>>, vector<64x16xbf16>
    %60 = vector.extract_strided_slice %58 {offsets = [0, 0], sizes = [1, 64], strides = [1, 1]} : vector<4x64xf32> to vector<1x64xf32>
    %61 = vector.extract_strided_slice %58 {offsets = [1, 0], sizes = [1, 64], strides = [1, 1]} : vector<4x64xf32> to vector<1x64xf32>
    %62 = vector.extract_strided_slice %58 {offsets = [2, 0], sizes = [1, 64], strides = [1, 1]} : vector<4x64xf32> to vector<1x64xf32>
    %63 = vector.extract_strided_slice %58 {offsets = [3, 0], sizes = [1, 64], strides = [1, 1]} : vector<4x64xf32> to vector<1x64xf32>
    %c1_i32_20 = arith.constant 1 : i32
    %64 = tpu.dynamic_rotate %57 by %c1_i32_20 dim 1 : vector<8x64xf32>, i32 -> vector<8x64xf32>
    %c63_i32 = arith.constant 63 : i32
    %65 = tpu.dynamic_rotate %57 by %c63_i32 dim 1 : vector<8x64xf32>, i32 -> vector<8x64xf32>
    %66 = vector.broadcast %60 : vector<1x64xf32> to vector<8x64xf32>
    %67 = arith.mulf %64, %66 : vector<8x64xf32>
    %68 = arith.addf %57, %67 : vector<8x64xf32>
    %69 = vector.broadcast %61 : vector<1x64xf32> to vector<8x64xf32>
    %70 = arith.mulf %65, %69 : vector<8x64xf32>
    %71 = arith.addf %68, %70 : vector<8x64xf32>
    %cst_21 = arith.constant 0.000000e+00 : f32
    %72 = vector.broadcast %cst_21 : f32 to vector<1x64xf32>
    %73 = arith.cmpf ogt, %60, %72 : vector<1x64xf32>
    %cst_22 = arith.constant 0xFF800000 : f32
    %74 = vector.shape_cast %73 : vector<1x64xi1> to vector<1x64xi1>
    %75 = vector.broadcast %74 : vector<1x64xi1> to vector<8x64xi1>
    %76 = vector.broadcast %cst_22 : f32 to vector<8x64xf32>
    %77 = arith.select %75, %64, %76 : vector<8x64xi1>, vector<8x64xf32>
    %cst_23 = arith.constant 0.000000e+00 : f32
    %78 = vector.broadcast %cst_23 : f32 to vector<1x64xf32>
    %79 = arith.cmpf ogt, %61, %78 : vector<1x64xf32>
    %cst_24 = arith.constant 0xFF800000 : f32
    %80 = vector.shape_cast %79 : vector<1x64xi1> to vector<1x64xi1>
    %81 = vector.broadcast %80 : vector<1x64xi1> to vector<8x64xi1>
    %82 = vector.broadcast %cst_24 : f32 to vector<8x64xf32>
    %83 = arith.select %81, %65, %82 : vector<8x64xi1>, vector<8x64xf32>
    %84 = arith.maximumf %77, %83 : vector<8x64xf32>
    %85 = arith.maximumf %57, %84 : vector<8x64xf32>
    %c8_i32 = arith.constant 8 : i32
    %86 = tpu.dynamic_rotate %71 by %c8_i32 dim 1 : vector<8x64xf32>, i32 -> vector<8x64xf32>
    %c56_i32 = arith.constant 56 : i32
    %87 = tpu.dynamic_rotate %71 by %c56_i32 dim 1 : vector<8x64xf32>, i32 -> vector<8x64xf32>
    %c8_i32_25 = arith.constant 8 : i32
    %88 = tpu.dynamic_rotate %85 by %c8_i32_25 dim 1 : vector<8x64xf32>, i32 -> vector<8x64xf32>
    %c56_i32_26 = arith.constant 56 : i32
    %89 = tpu.dynamic_rotate %85 by %c56_i32_26 dim 1 : vector<8x64xf32>, i32 -> vector<8x64xf32>
    %90 = vector.broadcast %62 : vector<1x64xf32> to vector<8x64xf32>
    %91 = arith.mulf %86, %90 : vector<8x64xf32>
    %92 = arith.addf %71, %91 : vector<8x64xf32>
    %93 = vector.broadcast %63 : vector<1x64xf32> to vector<8x64xf32>
    %94 = arith.mulf %87, %93 : vector<8x64xf32>
    %95 = arith.addf %92, %94 : vector<8x64xf32>
    %cst_27 = arith.constant 0.000000e+00 : f32
    %96 = vector.broadcast %cst_27 : f32 to vector<1x64xf32>
    %97 = arith.cmpf ogt, %62, %96 : vector<1x64xf32>
    %cst_28 = arith.constant 0xFF800000 : f32
    %98 = vector.shape_cast %97 : vector<1x64xi1> to vector<1x64xi1>
    %99 = vector.broadcast %98 : vector<1x64xi1> to vector<8x64xi1>
    %100 = vector.broadcast %cst_28 : f32 to vector<8x64xf32>
    %101 = arith.select %99, %88, %100 : vector<8x64xi1>, vector<8x64xf32>
    %cst_29 = arith.constant 0.000000e+00 : f32
    %102 = vector.broadcast %cst_29 : f32 to vector<1x64xf32>
    %103 = arith.cmpf ogt, %63, %102 : vector<1x64xf32>
    %cst_30 = arith.constant 0xFF800000 : f32
    %104 = vector.shape_cast %103 : vector<1x64xi1> to vector<1x64xi1>
    %105 = vector.broadcast %104 : vector<1x64xi1> to vector<8x64xi1>
    %106 = vector.broadcast %cst_30 : f32 to vector<8x64xf32>
    %107 = arith.select %105, %89, %106 : vector<8x64xi1>, vector<8x64xf32>
    %108 = arith.maximumf %101, %107 : vector<8x64xf32>
    %109 = arith.maximumf %85, %108 : vector<8x64xf32>
    %cst_31 = arith.constant 0.111111112 : f32
    %110 = vector.broadcast %cst_31 : f32 to vector<8x64xf32>
    %111 = arith.mulf %95, %110 : vector<8x64xf32>
    %112 = arith.addf %111, %109 : vector<8x64xf32>
    %113 = arith.truncf %112 : vector<8x64xf32> to vector<8x64xbf16>
    %cst_32 = arith.constant dense<0.000000e+00> : vector<8x16xf32>
    %114 = tpu.matmul %113, %59, %cst_32 {dimension_numbers = #tpu.dot_dimension_numbers<[1], [0], [0], [1], [0, 0, 1, 1], [], []>} : vector<8x64xbf16>, vector<64x16xbf16>, vector<8x16xf32> -> vector<8x16xf32>
    %c0_33 = arith.constant 0 : index
    %c0_34 = arith.constant 0 : index
    %115 = vector.load %arg6[%c0_33, %c0_34] : memref<8x16xf32, #tpu.memory_space<vmem>>, vector<8x16xf32>
    tpu.vector_store %arg6[%c0_33, %c0_34], %114 {strides = array<i32>} : memref<8x16xf32, #tpu.memory_space<vmem>>, vector<8x16xf32>,
    return
  }
  func.func @transform_0(%arg0: i32) -> (i32, i32) {
    %c0_i32 = arith.constant 0 : i32
    %c0_i32_0 = arith.constant 0 : i32
    %c0_i32_1 = arith.constant 0 : i32
    return %c0_i32, %c0_i32_0 : i32, i32
  }
  func.func @transform_1(%arg0: i32) -> (i32, i32) {
    %c0_i32 = arith.constant 0 : i32
    %c0_i32_0 = arith.constant 0 : i32
    %c0_i32_1 = arith.constant 0 : i32
    return %c0_i32, %c0_i32_0 : i32, i32
  }
  func.func @transform_2(%arg0: i32) -> (i32, i32) {
    %c0_i32 = arith.constant 0 : i32
    %c0_i32_0 = arith.constant 0 : i32
    %c0_i32_1 = arith.constant 0 : i32
    return %c0_i32, %c0_i32_0 : i32, i32
  }
  func.func @transform_3(%arg0: i32) -> (i32, i32) {
    %c0_i32 = arith.constant 0 : i32
    %c0_i32_0 = arith.constant 0 : i32
    %c0_i32_1 = arith.constant 0 : i32
    return %c0_i32, %c0_i32_0 : i32, i32
  }
  func.func @transform_4(%arg0: i32) -> (i32, i32) {
    %c0_i32 = arith.constant 0 : i32
    %c0_i32_0 = arith.constant 0 : i32
    %c0_i32_1 = arith.constant 0 : i32
    return %c0_i32, %c0_i32_0 : i32, i32
  }
  func.func @transform_5(%arg0: i32) -> (i32, i32) {
    %c0_i32 = arith.constant 0 : i32
    %c0_i32_0 = arith.constant 0 : i32
    %c0_i32_1 = arith.constant 0 : i32
    return %c0_i32, %c0_i32_0 : i32, i32
  }
}

</mosaic_0001>

<llo_original>
// kernel: tpu_custom_call.1
$region0: #{tpu_custom_call.1}
  #allocation0 [shape = 'u32[]', space=smem, size = 0x4, offset = 0x4, fixed_abs, tag = 'smem constant byte address 0x4 - core index']
  #allocation1 [shape = 'u32[144,128]{1,0:T(1,128)}', space=vmem, size = 0x12000, scoped, tag = 'internal scratch']
  %s0 = inlined_call_operand.vmem [shape: f32[8,256], index: 0, kind: input, shape index: {}]
  %s1 = inlined_call_operand.vmem [shape: f32[4,256], index: 1, kind: input, shape index: {}]
  %s2 = inlined_call_operand.vmem [shape: bf16[256,64], index: 2, kind: input, shape index: {}]
  %s3 = inlined_call_operand.vmem [shape: f32[4,64], index: 3, kind: input, shape index: {}]
  %s4 = inlined_call_operand.vmem [shape: bf16[64,16], index: 4, kind: input, shape index: {}]
  %s5 = inlined_call_operand.hbm [shape: f32[8,16], index: 5, kind: output, shape index: {}]
  %s6 = sld [smem:[#allocation0]]
  $region30: #{tpu_custom_call.1} parent=0
    _
  %s8 = ssub.s32 1, %s6
  %s9 = scalar_select 0, %s8, %s6
  $region1: #{tpu_custom_call.1} parent=0
    #allocation2 [shape = 'u8[4096]{0}', space=vmem, size = 0x1000, scoped, tag = 'output window, operand 0, single buffered']
    #allocation3 [shape = 's32[1]{0}', space=sflag, size = 0x4, scoped, tag = 'scoped memory for tpu_custom_call.1']
    %10 = vsyncpa [#allocation3], 0
    // Predicated region
    $region2: #{tpu_custom_call.1} parent=1 // pred_check
      _
    $region3: #{tpu_custom_call.1} parent=1 // pred_check_branch
      %12 = sbr.rel (0) target = $region5
    $region4: #{tpu_custom_call.1} parent=1 // pred_region
      _
    $region5: #{tpu_custom_call.1} parent=1 // pred_fallthru
      _
    // Predicated region
    $region6: #{tpu_custom_call.1} parent=1 // pred_check
      _
    $region7: #{tpu_custom_call.1} parent=1 // pred_check_branch
      %14 = sbr.rel (0) target = $region9
    $region8: #{tpu_custom_call.1} parent=1 // pred_region
      _
    $region9: #{tpu_custom_call.1} parent=1 // pred_fallthru
      _
    // Predicated region
    $region10: #{tpu_custom_call.1} parent=1 // pred_check
      _
    $region11: #{tpu_custom_call.1} parent=1 // pred_check_branch
      %16 = sbr.rel (0) target = $region13
    $region12: #{tpu_custom_call.1} parent=1 // pred_region
      _
    $region13: #{tpu_custom_call.1} parent=1 // pred_fallthru
      _
    // Predicated region
    $region14: #{tpu_custom_call.1} parent=1 // pred_check
      _
    $region15: #{tpu_custom_call.1} parent=1 // pred_check_branch
      %18 = sbr.rel (0) target = $region17
    $region16: #{tpu_custom_call.1} parent=1 // pred_region
      _
    $region17: #{tpu_custom_call.1} parent=1 // pred_fallthru
      _
    // Predicated region
    $region18: #{tpu_custom_call.1} parent=1 // pred_check
      _
    $region19: #{tpu_custom_call.1} parent=1 // pred_check_branch
      %20 = sbr.rel (0) target = $region21
    $region20: #{tpu_custom_call.1} parent=1 // pred_region
      _
    $region21: #{tpu_custom_call.1} parent=1 // pred_fallthru
      _
    %v22 = vld [vmem:[%s0] sm:$0xff]
    %v23 = vld [vmem:[%s0 + $0x8] sm:$0xff]
    %v24 = vld [vmem:[%s1] sm:$0xff]
    %v25 = vld [vmem:[%s2] sm:$0xf]
    %v26 = vld [vmem:[%s2 + $0x4] sm:$0xf]
    %v27 = vld [vmem:[%s2 + $0x8] sm:$0xf]
    %v28 = vld [vmem:[%s2 + $0xc] sm:$0xf]
    %v29 = vld [vmem:[%s2 + $0x10] sm:$0xf]
    %v30 = vld [vmem:[%s2 + $0x14] sm:$0xf]
    %v31 = vld [vmem:[%s2 + $0x18] sm:$0xf]
    %v32 = vld [vmem:[%s2 + $0x1c] sm:$0xf]
    %v33 = vld [vmem:[%s2 + $0x20] sm:$0xf]
    %v34 = vld [vmem:[%s2 + $0x24] sm:$0xf]
    %v35 = vld [vmem:[%s2 + $0x28] sm:$0xf]
    %v36 = vld [vmem:[%s2 + $0x2c] sm:$0xf]
    %v37 = vld [vmem:[%s2 + $0x30] sm:$0xf]
    %v38 = vld [vmem:[%s2 + $0x34] sm:$0xf]
    %v39 = vld [vmem:[%s2 + $0x38] sm:$0xf]
    %v40 = vld [vmem:[%s2 + $0x3c] sm:$0xf]
    %v41 = vld [vmem:[%s2 + $0x40] sm:$0xf]
    %v42 = vld [vmem:[%s2 + $0x44] sm:$0xf]
    %v43 = vld [vmem:[%s2 + $0x48] sm:$0xf]
    %v44 = vld [vmem:[%s2 + $0x4c] sm:$0xf]
    %v45 = vld [vmem:[%s2 + $0x50] sm:$0xf]
    %v46 = vld [vmem:[%s2 + $0x54] sm:$0xf]
    %v47 = vld [vmem:[%s2 + $0x58] sm:$0xf]
    %v48 = vld [vmem:[%s2 + $0x5c] sm:$0xf]
    %v49 = vld [vmem:[%s2 + $0x60] sm:$0xf]
    %v50 = vld [vmem:[%s2 + $0x64] sm:$0xf]
    %v51 = vld [vmem:[%s2 + $0x68] sm:$0xf]
    %v52 = vld [vmem:[%s2 + $0x6c] sm:$0xf]
    %v53 = vld [vmem:[%s2 + $0x70] sm:$0xf]
    %v54 = vld [vmem:[%s2 + $0x74] sm:$0xf]
    %v55 = vld [vmem:[%s2 + $0x78] sm:$0xf]
    %v56 = vld [vmem:[%s2 + $0x7c] sm:$0xf]
    %57 = vrot.lane.b32.xlu0 %v22, 1
    %v58 = vpop.permute.xlu0 %57
    %59 = vrot.lane.b32.xlu0 %v23, 1
    %v60 = vpop.permute.xlu0 %59
    %v61 = vlaneseq
    %v62 = vand.u32 %v61, 127
    %vm63 = vcmp.lt.s32.totalorder %v62, 1
    %v64 = vsel %vm63, %v58, %v60
    %v65 = vsel %vm63, %v60, %v58
    %66 = vrot.lane.b32.xlu0 %v22, 127
    %v67 = vpop.permute.xlu0 %66
    %68 = vrot.lane.b32.xlu0 %v23, 127
    %v69 = vpop.permute.xlu0 %68
    %vm70 = vcmp.lt.s32.totalorder %v62, 127
    %v71 = vsel %vm70, %v67, %v69
    %v72 = vsel %vm70, %v69, %v67
    %v74 = vlaneseq
    %v75 = vshrl.u32 %v74, 7
    %v76 = vsub.s32 0, %v75
    %v77 = vrot.slane %v24, %v76
    %v78 = vlaneseq
    %v79 = vshrl.u32 %v78, 7
    %v80 = vsub.s32 4, %v79
    %v81 = vrot.slane %v24, %v80
    %v84 = vlaneseq
    %v85 = vshrl.u32 %v84, 7
    %v86 = vsub.s32 0, %v85
    %v87 = vrot.slane %v77, %v86
    %v88 = vlaneseq
    %v89 = vshrl.u32 %v88, 7
    %v90 = vsub.s32 0, %v89
    %v91 = vrot.slane %v81, %v90
    %v92 = vmul.f32 %v65, %v87
    %v93 = vmul.f32 %v64, %v91
    %v94 = vadd.f32 %v22, %v92
    %v95 = vadd.f32 %v23, %v93
    %v96 = vlaneseq
    %v97 = vshrl.u32 %v96, 7
    %v98 = vsub.s32 1, %v97
    %v99 = vrot.slane %v24, %v98
    %v100 = vlaneseq
    %v101 = vshrl.u32 %v100, 7
    %v102 = vsub.s32 5, %v101
    %v103 = vrot.slane %v24, %v102
    %v106 = vlaneseq
    %v107 = vshrl.u32 %v106, 7
    %v108 = vsub.s32 1, %v107
    %v109 = vrot.slane %v99, %v108
    %v110 = vlaneseq
    %v111 = vshrl.u32 %v110, 7
    %v112 = vsub.s32 1, %v111
    %v113 = vrot.slane %v103, %v112
    %v114 = vmul.f32 %v71, %v109
    %v115 = vmul.f32 %v72, %v113
    %v116 = vadd.f32 %v94, %v114
    %v117 = vadd.f32 %v95, %v115
    %vm118 = vcmp.gt.f32.partialorder %v24, 0.0
    %v119 = vsel %vm118, 1, 0
    %v120 = vlaneseq
    %v121 = vshrl.u32 %v120, 7
    %v122 = vsub.s32 0, %v121
    %v123 = vrot.slane %v119, %v122
    %v124 = vlaneseq
    %v125 = vshrl.u32 %v124, 7
    %v126 = vsub.s32 4, %v125
    %v127 = vrot.slane %v119, %v126
    %v128 = vlaneseq
    %v129 = vshrl.u32 %v128, 7
    %v130 = vsub.s32 0, %v129
    %v131 = vrot.slane %v123, %v130
    %v132 = vlaneseq
    %v133 = vshrl.u32 %v132, 7
    %v134 = vsub.s32 0, %v133
    %v135 = vrot.slane %v127, %v134
    %vm136 = vcmp.eq.s32.totalorder %v131, 1
    %vm137 = vcmp.eq.s32.totalorder %v135, 1
    %v138 = vsel %vm136, %v65, -inf
    %v139 = vsel %vm137, %v64, -inf
    %v140 = vlaneseq
    %v141 = vshrl.u32 %v140, 7
    %v142 = vsub.s32 1, %v141
    %v143 = vrot.slane %v119, %v142
    %v144 = vlaneseq
    %v145 = vshrl.u32 %v144, 7
    %v146 = vsub.s32 5, %v145
    %v147 = vrot.slane %v119, %v146
    %v148 = vlaneseq
    %v149 = vshrl.u32 %v148, 7
    %v150 = vsub.s32 1, %v149
    %v151 = vrot.slane %v143, %v150
    %v152 = vlaneseq
    %v153 = vshrl.u32 %v152, 7
    %v154 = vsub.s32 1, %v153
    %v155 = vrot.slane %v147, %v154
    %vm156 = vcmp.eq.s32.totalorder %v151, 1
    %vm157 = vcmp.eq.s32.totalorder %v155, 1
    %v158 = vsel %vm156, %v71, -inf
    %v159 = vsel %vm157, %v72, -inf
    %v160 = vmax.f32 %v138, %v158
    %v161 = vmax.f32 %v139, %v159
    %v162 = vmax.f32 %v22, %v160
    %v163 = vmax.f32 %v23, %v161
    %164 = vrot.lane.b32.xlu0 %v116, 16
    %v165 = vpop.permute.xlu0 %164
    %166 = vrot.lane.b32.xlu0 %v117, 16
    %v167 = vpop.permute.xlu0 %166
    %vm168 = vcmp.lt.s32.totalorder %v62, 16
    %v169 = vsel %vm168, %v165, %v167
    %v170 = vsel %vm168, %v167, %v165
    %171 = vrot.lane.b32.xlu0 %v116, 112
    %v172 = vpop.permute.xlu0 %171
    %173 = vrot.lane.b32.xlu0 %v117, 112
    %v174 = vpop.permute.xlu0 %173
    %vm175 = vcmp.lt.s32.totalorder %v62, 112
    %v176 = vsel %vm175, %v172, %v174
    %v177 = vsel %vm175, %v174, %v172
    %178 = vrot.lane.b32.xlu0 %v162, 16
    %v179 = vpop.permute.xlu0 %178
    %180 = vrot.lane.b32.xlu0 %v163, 16
    %v181 = vpop.permute.xlu0 %180
    %v182 = vsel %vm168, %v179, %v181
    %v183 = vsel %vm168, %v181, %v179
    %184 = vrot.lane.b32.xlu0 %v162, 112
    %v185 = vpop.permute.xlu0 %184
    %186 = vrot.lane.b32.xlu0 %v163, 112
    %v187 = vpop.permute.xlu0 %186
    %v188 = vsel %vm175, %v185, %v187
    %v189 = vsel %vm175, %v187, %v185
    %v190 = vlaneseq
    %v191 = vshrl.u32 %v190, 7
    %v192 = vsub.s32 2, %v191
    %v193 = vrot.slane %v24, %v192
    %v194 = vlaneseq
    %v195 = vshrl.u32 %v194, 7
    %v196 = vsub.s32 6, %v195
    %v197 = vrot.slane %v24, %v196
    %v200 = vlaneseq
    %v201 = vshrl.u32 %v200, 7
    %v202 = vsub.s32 2, %v201
    %v203 = vrot.slane %v193, %v202
    %v204 = vlaneseq
    %v205 = vshrl.u32 %v204, 7
    %v206 = vsub.s32 2, %v205
    %v207 = vrot.slane %v197, %v206
    %v208 = vmul.f32 %v170, %v203
    %v209 = vmul.f32 %v169, %v207
    %v210 = vadd.f32 %v116, %v208
    %v211 = vadd.f32 %v117, %v209
    %v212 = vlaneseq
    %v213 = vshrl.u32 %v212, 7
    %v214 = vsub.s32 3, %v213
    %v215 = vrot.slane %v24, %v214
    %v216 = vlaneseq
    %v217 = vshrl.u32 %v216, 7
    %v218 = vsub.s32 7, %v217
    %v219 = vrot.slane %v24, %v218
    %v222 = vlaneseq
    %v223 = vshrl.u32 %v222, 7
    %v224 = vsub.s32 3, %v223
    %v225 = vrot.slane %v215, %v224
    %v226 = vlaneseq
    %v227 = vshrl.u32 %v226, 7
    %v228 = vsub.s32 3, %v227
    %v229 = vrot.slane %v219, %v228
    %v230 = vmul.f32 %v176, %v225
    %v231 = vmul.f32 %v177, %v229
    %v232 = vadd.f32 %v210, %v230
    %v233 = vadd.f32 %v211, %v231
    %v234 = vlaneseq
    %v235 = vshrl.u32 %v234, 7
    %v236 = vsub.s32 2, %v235
    %v237 = vrot.slane %v119, %v236
    %v238 = vlaneseq
    %v239 = vshrl.u32 %v238, 7
    %v240 = vsub.s32 6, %v239
    %v241 = vrot.slane %v119, %v240
    %v242 = vlaneseq
    %v243 = vshrl.u32 %v242, 7
    %v244 = vsub.s32 2, %v243
    %v245 = vrot.slane %v237, %v244
    %v246 = vlaneseq
    %v247 = vshrl.u32 %v246, 7
    %v248 = vsub.s32 2, %v247
    %v249 = vrot.slane %v241, %v248
    %vm250 = vcmp.eq.s32.totalorder %v245, 1
    %vm251 = vcmp.eq.s32.totalorder %v249, 1
    %v252 = vsel %vm250, %v183, -inf
    %v253 = vsel %vm251, %v182, -inf
    %v254 = vlaneseq
    %v255 = vshrl.u32 %v254, 7
    %v256 = vsub.s32 3, %v255
    %v257 = vrot.slane %v119, %v256
    %v258 = vlaneseq
    %v259 = vshrl.u32 %v258, 7
    %v260 = vsub.s32 7, %v259
    %v261 = vrot.slane %v119, %v260
    %v262 = vlaneseq
    %v263 = vshrl.u32 %v262, 7
    %v264 = vsub.s32 3, %v263
    %v265 = vrot.slane %v257, %v264
    %v266 = vlaneseq
    %v267 = vshrl.u32 %v266, 7
    %v268 = vsub.s32 3, %v267
    %v269 = vrot.slane %v261, %v268
    %vm270 = vcmp.eq.s32.totalorder %v265, 1
    %vm271 = vcmp.eq.s32.totalorder %v269, 1
    %v272 = vsel %vm270, %v188, -inf
    %v273 = vsel %vm271, %v189, -inf
    %v274 = vmax.f32 %v252, %v272
    %v275 = vmax.f32 %v253, %v273
    %v276 = vmax.f32 %v162, %v274
    %v277 = vmax.f32 %v163, %v275
    %v278 = vmul.f32 %v232, 0.11111111
    %v279 = vmul.f32 %v233, 0.11111111
    %v280 = vadd.f32 %v278, %v276
    %v281 = vadd.f32 %v279, %v277
    %v282 = vpack.c.bf16 %v280, %v280
    %v283 = vpack.c.bf16 %v281, %v281
    %v316 = vunpack.c.l.b16 %v25
    %v317 = vunpack.c.l.b16 %v26
    %v318 = vunpack.c.l.b16 %v27
    %v319 = vunpack.c.l.b16 %v28
    %v320 = vunpack.c.l.b16 %v29
    %v321 = vunpack.c.l.b16 %v30
    %v322 = vunpack.c.l.b16 %v31
    %v323 = vunpack.c.l.b16 %v32
    %v324 = vunpack.c.l.b16 %v33
    %v325 = vunpack.c.l.b16 %v34
    %v326 = vunpack.c.l.b16 %v35
    %v327 = vunpack.c.l.b16 %v36
    %v328 = vunpack.c.l.b16 %v37
    %v329 = vunpack.c.l.b16 %v38
    %v330 = vunpack.c.l.b16 %v39
    %v331 = vunpack.c.l.b16 %v40
    %v332 = vunpack.c.l.b16 %v41
    %v333 = vunpack.c.l.b16 %v42
    %v334 = vunpack.c.l.b16 %v43
    %v335 = vunpack.c.l.b16 %v44
    %v336 = vunpack.c.l.b16 %v45
    %v337 = vunpack.c.l.b16 %v46
    %v338 = vunpack.c.l.b16 %v47
    %v339 = vunpack.c.l.b16 %v48
    %v340 = vunpack.c.l.b16 %v49
    %v341 = vunpack.c.l.b16 %v50
    %v342 = vunpack.c.l.b16 %v51
    %v343 = vunpack.c.l.b16 %v52
    %v344 = vunpack.c.l.b16 %v53
    %v345 = vunpack.c.l.b16 %v54
    %v346 = vunpack.c.l.b16 %v55
    %v347 = vunpack.c.l.b16 %v56
    %v348 = vpack.c.b16 %v317, %v316
    %v349 = vpack.c.b16 %v319, %v318
    %v350 = vpack.c.b16 %v321, %v320
    %v351 = vpack.c.b16 %v323, %v322
    %v352 = vpack.c.b16 %v325, %v324
    %v353 = vpack.c.b16 %v327, %v326
    %v354 = vpack.c.b16 %v329, %v328
    %v355 = vpack.c.b16 %v331, %v330
    %v356 = vpack.c.b16 %v333, %v332
    %v357 = vpack.c.b16 %v335, %v334
    %v358 = vpack.c.b16 %v337, %v336
    %v359 = vpack.c.b16 %v339, %v338
    %v360 = vpack.c.b16 %v341, %v340
    %v361 = vpack.c.b16 %v343, %v342
    %v362 = vpack.c.b16 %v345, %v344
    %v363 = vpack.c.b16 %v347, %v346
    %380 = vmatprep.subr.bf16.mxu0 0
    %381 = vmatpush1.bf16.msra.mxu0 %v355
    %382 = vmatprep.subr.bf16.mxu0 0
    %383 = vmatpush1.bf16.msra.mxu0 %v354
    %384 = vmatprep.subr.bf16.mxu0 0
    %385 = vmatpush1.bf16.msra.mxu0 %v353
    %386 = vmatprep.subr.bf16.mxu0 0
    %387 = vmatpush1.bf16.msra.mxu0 %v352
    %388 = vmatprep.subr.bf16.mxu0 0
    %389 = vmatpush1.bf16.msra.mxu0 %v351
    %390 = vmatprep.subr.bf16.mxu0 0
    %391 = vmatpush1.bf16.msra.mxu0 %v350
    %392 = vmatprep.subr.bf16.mxu0 0
    %393 = vmatpush1.bf16.msra.mxu0 %v349
    %394 = vmatprep.subr.bf16.mxu0 0
    %395 = vmatpush1.bf16.msra.mxu0 %v348
    %396 = vmatprep.subr.bf16.mxu0 0
    %397 = vmatpush2.bf16.msra.mxu0 %v363
    %398 = vmatprep.subr.bf16.mxu0 0
    %399 = vmatpush2.bf16.msra.mxu0 %v362
    %400 = vmatprep.subr.bf16.mxu0 0
    %401 = vmatpush2.bf16.msra.mxu0 %v361
    %402 = vmatprep.subr.bf16.mxu0 0
    %403 = vmatpush2.bf16.msra.mxu0 %v360
    %404 = vmatprep.subr.bf16.mxu0 0
    %405 = vmatpush2.bf16.msra.mxu0 %v359
    %406 = vmatprep.subr.bf16.mxu0 0
    %407 = vmatpush2.bf16.msra.mxu0 %v358
    %408 = vmatprep.subr.bf16.mxu0 0
    %409 = vmatpush2.bf16.msra.mxu0 %v357
    %410 = vmatprep.subr.bf16.mxu0 0
    %411 = vmatpush2.bf16.msra.mxu0 %v356
    %412 = vmatprep.mubr.bf16.mxu0 %v283
    %413 = vmatmul.mubr.bf16.gmra.mxu0 %v282
    %v414 = vpop.f32.mrf.mxu0
    %v415 = vadd.f32 0.0, %v414
    %v416 = vpop.f32.mrf.mxu0
    %v417 = vpop.f32.mrf.mxu0
    %v418 = vpop.f32.mrf.mxu0
    %419 = vdwg.mxu0
    %v420 = vld [vmem:[%s3] sm:$0xf]
    %v421 = vld [vmem:[%s4] sm:$0xf]
    %v422 = vld [vmem:[%s4 + $0x4] sm:$0xf]
    %v423 = vld [vmem:[%s4 + $0x8] sm:$0xf]
    %v424 = vld [vmem:[%s4 + $0xc] sm:$0xf]
    %v425 = vld [vmem:[%s4 + $0x10] sm:$0xf]
    %v426 = vld [vmem:[%s4 + $0x14] sm:$0xf]
    %v427 = vld [vmem:[%s4 + $0x18] sm:$0xf]
    %v428 = vld [vmem:[%s4 + $0x1c] sm:$0xf]
    %vm429 = vcmask 1048064
    %430 = vrot.lane.b32.xlu0 %v415, 64
    %v431 = vpop.permute.xlu0 %430
    %v432 = vsel %vm429, %v431, %v415
    %433 = vrot.lane.b32.xlu0 %v432, 64
    %v434 = vpop.permute.xlu0 %433
    %v435 = vsel %vm429, %v434, %v415
    %v436 = vlaneseq
    %v437 = vshrl.u32 %v436, 7
    %v438 = vsub.s32 0, %v437
    %v439 = vrot.slane %v420, %v438
    %441 = vrot.lane.b32.xlu0 %v439, 63
    %v442 = vpop.permute.xlu0 %441
    %v444 = vmul.f32 %v435, %v442
    %446 = vrot.lane.b32.xlu0 %v444, 65
    %v447 = vpop.permute.xlu0 %446
    %v449 = vadd.f32 %v415, %v447
    %v450 = vlaneseq
    %v451 = vshrl.u32 %v450, 7
    %v452 = vsub.s32 1, %v451
    %v453 = vrot.slane %v420, %v452
    %455 = vrot.lane.b32.xlu0 %v453, 1
    %v456 = vpop.permute.xlu0 %455
    %v458 = vmul.f32 %v435, %v456
    %460 = vrot.lane.b32.xlu0 %v458, 127
    %v461 = vpop.permute.xlu0 %460
    %v463 = vadd.f32 %v449, %v461
    %vm464 = vcmp.gt.f32.partialorder %v420, 0.0
    %v465 = vsel %vm464, 1, 0
    %v466 = vlaneseq
    %v467 = vshrl.u32 %v466, 7
    %v468 = vsub.s32 0, %v467
    %v469 = vrot.slane %v465, %v468
    %vm470 = vcmp.eq.s32.totalorder %v469, 1
    %472 = vrot.lane.b32.xlu0 %v435, 65
    %v473 = vpop.permute.xlu0 %472
    %v475 = vsel %vm470, %v473, -inf
    %v476 = vlaneseq
    %v477 = vshrl.u32 %v476, 7
    %v478 = vsub.s32 1, %v477
    %v479 = vrot.slane %v465, %v478
    %vm480 = vcmp.eq.s32.totalorder %v479, 1
    %481 = vrot.lane.b32.xlu0 %v435, 127
    %v482 = vpop.permute.xlu0 %481
    %v484 = vsel %vm480, %v482, -inf
    %v485 = vmax.f32 %v475, %v484
    %v486 = vmax.f32 %v415, %v485
    %487 = vrot.lane.b32.xlu0 %v463, 64
    %v488 = vpop.permute.xlu0 %487
    %v489 = vsel %vm429, %v488, %v463
    %490 = vrot.lane.b32.xlu0 %v489, 64
    %v491 = vpop.permute.xlu0 %490
    %v492 = vsel %vm429, %v491, %v463
    %493 = vrot.lane.b32.xlu0 %v486, 64
    %v494 = vpop.permute.xlu0 %493
    %v495 = vsel %vm429, %v494, %v486
    %496 = vrot.lane.b32.xlu0 %v495, 64
    %v497 = vpop.permute.xlu0 %496
    %v498 = vsel %vm429, %v497, %v486
    %v499 = vlaneseq
    %v500 = vshrl.u32 %v499, 7
    %v501 = vsub.s32 2, %v500
    %v502 = vrot.slane %v420, %v501
    %504 = vrot.lane.b32.xlu0 %v502, 56
    %v505 = vpop.permute.xlu0 %504
    %v507 = vmul.f32 %v492, %v505
    %509 = vrot.lane.b32.xlu0 %v507, 72
    %v510 = vpop.permute.xlu0 %509
    %v512 = vadd.f32 %v463, %v510
    %v513 = vlaneseq
    %v514 = vshrl.u32 %v513, 7
    %v515 = vsub.s32 3, %v514
    %v516 = vrot.slane %v420, %v515
    %518 = vrot.lane.b32.xlu0 %v516, 8
    %v519 = vpop.permute.xlu0 %518
    %v521 = vmul.f32 %v492, %v519
    %523 = vrot.lane.b32.xlu0 %v521, 120
    %v524 = vpop.permute.xlu0 %523
    %v526 = vadd.f32 %v512, %v524
    %v527 = vlaneseq
    %v528 = vshrl.u32 %v527, 7
    %v529 = vsub.s32 2, %v528
    %v530 = vrot.slane %v465, %v529
    %vm531 = vcmp.eq.s32.totalorder %v530, 1
    %533 = vrot.lane.b32.xlu0 %v498, 72
    %v534 = vpop.permute.xlu0 %533
    %v536 = vsel %vm531, %v534, -inf
    %v537 = vlaneseq
    %v538 = vshrl.u32 %v537, 7
    %v539 = vsub.s32 3, %v538
    %v540 = vrot.slane %v465, %v539
    %vm541 = vcmp.eq.s32.totalorder %v540, 1
    %542 = vrot.lane.b32.xlu0 %v498, 120
    %v543 = vpop.permute.xlu0 %542
    %v545 = vsel %vm541, %v543, -inf
    %v546 = vmax.f32 %v536, %v545
    %v547 = vmax.f32 %v486, %v546
    %v548 = vmul.f32 %v526, 0.11111111
    %v549 = vadd.f32 %v548, %v547
    %v550 = vpack.c.bf16 %v549, %v549
    %v559 = vunpack.c.l.b16 %v421
    %v560 = vunpack.c.l.b16 %v422
    %v561 = vunpack.c.l.b16 %v423
    %v562 = vunpack.c.l.b16 %v424
    %v563 = vunpack.c.l.b16 %v425
    %v564 = vunpack.c.l.b16 %v426
    %v565 = vunpack.c.l.b16 %v427
    %v566 = vunpack.c.l.b16 %v428
    %v567 = vpack.c.b16 %v560, %v559
    %v568 = vpack.c.b16 %v562, %v561
    %v569 = vpack.c.b16 %v564, %v563
    %v570 = vpack.c.b16 %v566, %v565
    %vm575 = vcmask 523264
    %v577 = vsel %vm575, %v550, 0
    %579 = vmatprep.subr.bf16.mxu0 0
    %580 = vmatpush1.bf16.msra.mxu0 0
    %581 = vmatprep.subr.bf16.mxu0 0
    %582 = vmatpush1.bf16.msra.mxu0 0
    %583 = vmatprep.subr.bf16.mxu0 0
    %584 = vmatpush1.bf16.msra.mxu0 0
    %585 = vmatprep.subr.bf16.mxu0 0
    %586 = vmatpush1.bf16.msra.mxu0 0
    %587 = vmatprep.subr.bf16.mxu0 0
    %588 = vmatpush1.bf16.msra.mxu0 %v570
    %589 = vmatprep.subr.bf16.mxu0 0
    %590 = vmatpush1.bf16.msra.mxu0 %v569
    %591 = vmatprep.subr.bf16.mxu0 0
    %592 = vmatpush1.bf16.msra.mxu0 %v568
    %593 = vmatprep.subr.bf16.mxu0 0
    %594 = vmatpush1.bf16.msra.mxu0 %v567
    %595 = vmatprep.subr.bf16.mxu0 0
    %596 = vmatpush2.bf16.msra.mxu0 0
    %597 = vmatprep.subr.bf16.mxu0 0
    %598 = vmatpush2.bf16.msra.mxu0 0
    %599 = vmatprep.subr.bf16.mxu0 0
    %600 = vmatpush2.bf16.msra.mxu0 0
    %601 = vmatprep.subr.bf16.mxu0 0
    %602 = vmatpush2.bf16.msra.mxu0 0
    %603 = vmatprep.subr.bf16.mxu0 0
    %604 = vmatpush2.bf16.msra.mxu0 0
    %605 = vmatprep.subr.bf16.mxu0 0
    %606 = vmatpush2.bf16.msra.mxu0 0
    %607 = vmatprep.subr.bf16.mxu0 0
    %608 = vmatpush2.bf16.msra.mxu0 0
    %609 = vmatprep.subr.bf16.mxu0 0
    %610 = vmatpush2.bf16.msra.mxu0 0
    %611 = vmatprep.mubr.bf16.mxu0 0
    %612 = vmatmul.mubr.bf16.gmra.mxu0 %v577
    %v613 = vpop.f32.mrf.mxu0
    %v614 = vadd.f32 0.0, %v613
    %v615 = vpop.f32.mrf.mxu0
    %v616 = vpop.f32.mrf.mxu0
    %v617 = vpop.f32.mrf.mxu0
    %618 = vdwg.mxu0
    %vm619 = vcmask 130048
    %620 = vst.msk [vmem:[#allocation2] sm:$0xff] %vm619, %v614
    // Predicated region
    $region22: #{tpu_custom_call.1} parent=1 // pred_check
      _
    $region23: #{tpu_custom_call.1} parent=1 // pred_check_branch
      %622 = sbr.rel (0) target = $region25
    $region24: #{tpu_custom_call.1} parent=1 // pred_region
      %s624 = ssub.s32 128, 128
      %625 = vsyncadd [#allocation3], %s624
      %s627 = sshll.u32 [#allocation2], 4
      %s628 = int_to_ptr.vmem [resolvable:$true] %s627
      %630 = dma.vmem_to_hbm [thread:$0]  %s628, 128, %s5, [#allocation3]
    $region25: #{tpu_custom_call.1} parent=1 // pred_fallthru
      _
    // Predicated region
    $region26: #{tpu_custom_call.1} parent=1 // pred_check
      _
    $region27: #{tpu_custom_call.1} parent=1 // pred_check_branch
      %632 = sbr.rel (0) target = $region29
    $region28: #{tpu_custom_call.1} parent=1 // pred_region
      %633 = dma.done [#allocation3], 128
    $region29: #{tpu_custom_call.1} parent=1 // pred_fallthru
      _
    %634 = vsyncpa [#allocation3], 1

</llo_original>
